<compile_context>
chip_gen: v7x
topology: tpu7x:2x2x1
jax: 0.10.0
libtpu: 0.0.40
codegen_flags: <defaults>
</compile_context>

<pallas_src>
import functools

import jax
import jax.numpy as jnp
from jax import lax
from jax.experimental import pallas as pl
from jax.experimental.pallas import tpu as pltpu

LANES = 128
SUBLANES = 8
EPS = 1e-7


def _round_up(x, m):
    return ((x + m - 1) // m) * m


def _bce_smooth_partial_kernel(pred_ref, target_ref, partial_ref, *,
                               smoothing, tile_rows, valid_count, needs_mask):
    p = pred_ref[...].astype(jnp.float32)
    t = target_ref[...].astype(jnp.float32)

    # Label smoothing (single fused multiply-add per element).
    t_s = t * (1.0 - smoothing) + 0.5 * smoothing

    # Elementwise BCE, refactored: t_s*lp + (1 - t_s)*lq == t_s*(lp - lq) + lq.
    lp = jnp.log(p + EPS)
    lq = jnp.log((1.0 - p) + EPS)
    bce = -(t_s * (lp - lq) + lq)

    if needs_mask:
        # Zero out the padded tail (padding only exists past `valid_count`).
        base = pl.program_id(0) * (tile_rows * LANES)
        row = lax.broadcasted_iota(jnp.int32, (tile_rows, LANES), 0)
        lane = lax.broadcasted_iota(jnp.int32, (tile_rows, LANES), 1)
        flat_idx = base + row * LANES + lane
        bce = jnp.where(flat_idx < valid_count, bce, 0.0)

    # Reduce the (tile_rows, 128) tile to one (8, 128) vreg partial using pure
    # VPU adds; no cross-lane XLU reduction or loop-carried scalar dependency.
    partial_ref[...] = jnp.sum(
        bce.reshape(tile_rows // SUBLANES, SUBLANES, LANES), axis=0)


def bce_loss_with_smoothing(pred, target, smoothing=0.1, max_tile_rows=2048):
    """Pallas-TPU equivalent of BCELossWithSmoothing.forward. Returns a scalar."""
    assert pred.shape == target.shape, "pred/target must have the same shape"
    total = pred.size

    # Flatten row-major into a lane-dense (rows, 128) slab.
    m = pl.cdiv(total, LANES)                             # rows needed
    tile_rows = min(int(max_tile_rows), _round_up(m, SUBLANES))
    m_pad = _round_up(m, tile_rows)
    pad = m_pad * LANES - total

    pred_flat = pred.reshape(-1).astype(jnp.float32)
    target_flat = target.reshape(-1).astype(jnp.float32)
    if pad:
        # pred padded with 0.5 keeps both logs finite; padded elements are
        # masked out of the sum inside the kernel.
        pred_flat = jnp.concatenate(
            [pred_flat, jnp.full((pad,), 0.5, jnp.float32)])
        target_flat = jnp.concatenate(
            [target_flat, jnp.zeros((pad,), jnp.float32)])

    pred2d = pred_flat.reshape(m_pad, LANES)
    target2d = target_flat.reshape(m_pad, LANES)

    num_blocks = m_pad // tile_rows

    kernel = functools.partial(
        _bce_smooth_partial_kernel,
        smoothing=float(smoothing),
        tile_rows=tile_rows,
        valid_count=int(total),
        needs_mask=pad > 0,
    )

    partials = pl.pallas_call(
        kernel,
        out_shape=jax.ShapeDtypeStruct((num_blocks, SUBLANES, LANES),
                                       jnp.float32),
        grid=(num_blocks,),
        in_specs=[
            pl.BlockSpec((tile_rows, LANES), lambda i: (i, 0)),
            pl.BlockSpec((tile_rows, LANES), lambda i: (i, 0)),
        ],
        out_specs=pl.BlockSpec((None, SUBLANES, LANES), lambda i: (i, 0, 0)),
        compiler_params=pltpu.CompilerParams(
            # Independent per-block partial sums: fully parallel grid axis
            # (lets megacore split the row range across both TCs on v7x).
            dimension_semantics=("parallel",),
        ),
    )(pred2d, target2d)

    # Final (tiny) reduction + mean in the wrapper.
    return jnp.sum(partials) / jnp.float32(total)


def _reference(pred, target, smoothing=0.1):
    t = target * (1.0 - smoothing) + 0.5 * smoothing
    bce = -(t * jnp.log(pred + EPS) + (1.0 - t) * jnp.log(1.0 - pred + EPS))
    return jnp.mean(bce)


if __name__ == "__main__":
    key = jax.random.PRNGKey(0)
    k_pred, k_target = jax.random.split(key)

    # NCHW, shapes consistent with a small BCE use-case (probabilities in (0,1))
    B, C, H, W = 2, 4, 16, 16
    pred = jax.random.uniform(
        k_pred, (B, C, H, W), jnp.float32, minval=0.01, maxval=0.99)
    target = (jax.random.uniform(k_target, (B, C, H, W), jnp.float32)
              > 0.5).astype(jnp.float32)

    loss = bce_loss_with_smoothing(pred, target, smoothing=0.1)
    loss = jax.block_until_ready(loss)

    ref = _reference(pred, target, smoothing=0.1)
    assert jnp.allclose(loss, ref, rtol=1e-5, atol=1e-6), (loss, ref)

    # Also exercise a ragged (non-128-multiple) shape to check the padding/mask path.
    p2 = jax.random.uniform(k_pred, (3, 5, 7, 11), jnp.float32,
                            minval=0.01, maxval=0.99)
    t2 = (jax.random.uniform(k_target, (3, 5, 7, 11), jnp.float32)
          > 0.5).astype(jnp.float32)
    loss2 = jax.block_until_ready(bce_loss_with_smoothing(p2, t2, smoothing=0.1))
    ref2 = _reference(p2, t2, smoothing=0.1)
    assert jnp.allclose(loss2, ref2, rtol=1e-5, atol=1e-6), (loss2, ref2)

    print("KERNEL_OK")
</pallas_src>

<mosaic_0001>
module attributes {stable_mosaic.version = 11 : i64} {
  func.func @_bce_smooth_partial_kernel(%arg0: i32, %arg1: memref<16x128xf32, #tpu.memory_space<vmem>>, %arg2: memref<16x128xf32, #tpu.memory_space<vmem>>, %arg3: memref<1x8x128xf32, #tpu.memory_space<vmem>>) attributes {dimension_semantics = [#tpu.dimension_semantics<parallel>], iteration_bounds = array<i64: 1>, scalar_prefetch = 0 : i64, scratch_operands = 0 : i64, tpu.core_type = #tpu.core_type<tc>, window_params = [{transform_indices = @transform_0, window_bounds = array<i64: 16, 128>}, {transform_indices = @transform_1, window_bounds = array<i64: 16, 128>}, {transform_indices = @transform_2, window_bounds = array<i64: 1, 8, 128>}]} {
    %c0 = arith.constant 0 : index
    %c0_0 = arith.constant 0 : index
    %0 = vector.load %arg1[%c0, %c0_0] : memref<16x128xf32, #tpu.memory_space<vmem>>, vector<16x128xf32>
    %c0_1 = arith.constant 0 : index
    %c0_2 = arith.constant 0 : index
    %1 = vector.load %arg2[%c0_1, %c0_2] : memref<16x128xf32, #tpu.memory_space<vmem>>, vector<16x128xf32>
    %cst = arith.constant 0.899999976 : f32
    %2 = vector.broadcast %cst : f32 to vector<16x128xf32>
    %3 = arith.mulf %1, %2 : vector<16x128xf32>
    %cst_3 = arith.constant 5.000000e-02 : f32
    %4 = vector.broadcast %cst_3 : f32 to vector<16x128xf32>
    %5 = arith.addf %3, %4 : vector<16x128xf32>
    %cst_4 = arith.constant 1.000000e-07 : f32
    %6 = vector.broadcast %cst_4 : f32 to vector<16x128xf32>
    %7 = arith.addf %0, %6 : vector<16x128xf32>
    %8 = math.log %7 : vector<16x128xf32>
    %cst_5 = arith.constant 1.000000e+00 : f32
    %9 = vector.broadcast %cst_5 : f32 to vector<16x128xf32>
    %10 = arith.subf %9, %0 : vector<16x128xf32>
    %cst_6 = arith.constant 1.000000e-07 : f32
    %11 = vector.broadcast %cst_6 : f32 to vector<16x128xf32>
    %12 = arith.addf %10, %11 : vector<16x128xf32>
    %13 = math.log %12 : vector<16x128xf32>
    %14 = arith.subf %8, %13 : vector<16x128xf32>
    %15 = arith.mulf %5, %14 : vector<16x128xf32>
    %16 = arith.addf %15, %13 : vector<16x128xf32>
    %cst_7 = arith.constant 0.000000e+00 : f32
    %17 = vector.broadcast %cst_7 : f32 to vector<16x128xf32>
    %18 = arith.subf %17, %16 : vector<16x128xf32>
    %19 = vector.shape_cast %18 : vector<16x128xf32> to vector<2x8x128xf32>
    %cst_8 = arith.constant dense<0.000000e+00> : vector<8x128xf32>
    %20 = vector.multi_reduction <add>, %19, %cst_8 [0] : vector<2x8x128xf32> to vector<8x128xf32>
    %c0_9 = arith.constant 0 : index
    %c0_10 = arith.constant 0 : index
    %c0_11 = arith.constant 0 : index
    %21 = vector.load %arg3[%c0_9, %c0_10, %c0_11] : memref<1x8x128xf32, #tpu.memory_space<vmem>>, vector<1x8x128xf32>
    %22 = vector.shape_cast %21 : vector<1x8x128xf32> to vector<8x128xf32>
    %23 = vector.shape_cast %20 : vector<8x128xf32> to vector<1x8x128xf32>
    tpu.vector_store %arg3[%c0_9, %c0_10, %c0_11], %23 {strides = array<i32>} : memref<1x8x128xf32, #tpu.memory_space<vmem>>, vector<1x8x128xf32>,
    return
  }
  func.func @transform_0(%arg0: i32) -> (i32, i32) {
    %c0_i32 = arith.constant 0 : i32
    %c0_i32_0 = arith.constant 0 : i32
    return %arg0, %c0_i32 : i32, i32
  }
  func.func @transform_1(%arg0: i32) -> (i32, i32) {
    %c0_i32 = arith.constant 0 : i32
    %c0_i32_0 = arith.constant 0 : i32
    return %arg0, %c0_i32 : i32, i32
  }
  func.func @transform_2(%arg0: i32) -> (i32, i32, i32) {
    %c0_i32 = arith.constant 0 : i32
    %c0_i32_0 = arith.constant 0 : i32
    %c0_i32_1 = arith.constant 0 : i32
    return %arg0, %c0_i32, %c0_i32_0 : i32, i32, i32
  }
}

</mosaic_0001>

<llo_original>
// kernel: tpu_custom_call.1
$region0: #{tpu_custom_call.1}
  #allocation0 [shape = 'u32[]', space=smem, size = 0x4, offset = 0x4, fixed_abs, tag = 'smem constant byte address 0x4 - core index']
  #allocation1 [shape = 'u32[144,128]{1,0:T(1,128)}', space=vmem, size = 0x12000, scoped, tag = 'internal scratch']
  %s0 = inlined_call_operand.hbm [shape: f32[16,128], index: 0, kind: input, shape index: {}]
  %s1 = inlined_call_operand.hbm [shape: f32[16,128], index: 1, kind: input, shape index: {}]
  %s2 = inlined_call_operand.hbm [shape: f32[1,8,128], index: 2, kind: output, shape index: {}]
  %s3 = sld [smem:[#allocation0]]
  $region26: #{tpu_custom_call.1} parent=0
    _
  %s5 = ssub.s32 1, %s3
  %s6 = scalar_select 0, %s5, %s3
  $region1: #{tpu_custom_call.1} parent=0
    #allocation2 [shape = 'u8[8192]{0}', space=vmem, size = 0x2000, scoped, tag = 'input window, operand 0, single buffered']
    #allocation3 [shape = 's32[1]{0}', space=sflag, size = 0x4, scoped, tag = 'scoped memory for tpu_custom_call.1']
    #allocation4 [shape = 's32[1]{0}', space=sflag, size = 0x4, scoped, tag = 'scoped memory for tpu_custom_call.1']
    #allocation5 [shape = 'u8[8192]{0}', space=vmem, size = 0x2000, scoped, tag = 'input window, operand 1, single buffered']
    #allocation6 [shape = 's32[1]{0}', space=sflag, size = 0x4, scoped, tag = 'scoped memory for tpu_custom_call.1']
    #allocation7 [shape = 'u8[4096]{0}', space=vmem, size = 0x1000, scoped, tag = 'output window, operand 0, single buffered']
    %7 = vsyncpa [#allocation3], 0
    %8 = vsyncpa [#allocation6], 0
    %9 = vsyncpa [#allocation4], 0
    // Predicated region
    $region2: #{tpu_custom_call.1} parent=1 // pred_check
      _
    $region3: #{tpu_custom_call.1} parent=1 // pred_check_branch
      %11 = sbr.rel (0) target = $region5
    $region4: #{tpu_custom_call.1} parent=1 // pred_region
      %s13 = ssub.s32 256, 256
      %14 = vsyncadd [#allocation3], %s13
      %s15 = sshll.u32 [#allocation2], 4
      %s16 = int_to_ptr.vmem [resolvable:$true] %s15
      %21 = dma.hbm_to_vmem [thread:$0]  %s0, 256, %s16, [#allocation3], 128, 128, 8
    $region5: #{tpu_custom_call.1} parent=1 // pred_fallthru
      _
    // Predicated region
    $region6: #{tpu_custom_call.1} parent=1 // pred_check
      _
    $region7: #{tpu_custom_call.1} parent=1 // pred_check_branch
      %23 = sbr.rel (0) target = $region9
    $region8: #{tpu_custom_call.1} parent=1 // pred_region
      %s25 = ssub.s32 256, 256
      %26 = vsyncadd [#allocation6], %s25
      %s27 = sshll.u32 [#allocation5], 4
      %s28 = int_to_ptr.vmem [resolvable:$true] %s27
      %33 = dma.hbm_to_vmem [thread:$0]  %s1, 256, %s28, [#allocation6], 128, 128, 8
    $region9: #{tpu_custom_call.1} parent=1 // pred_fallthru
      _
    // Predicated region
    $region10: #{tpu_custom_call.1} parent=1 // pred_check
      _
    $region11: #{tpu_custom_call.1} parent=1 // pred_check_branch
      %35 = sbr.rel (0) target = $region13
    $region12: #{tpu_custom_call.1} parent=1 // pred_region
      %36 = dma.done [#allocation3], 256
    $region13: #{tpu_custom_call.1} parent=1 // pred_fallthru
      _
    // Predicated region
    $region14: #{tpu_custom_call.1} parent=1 // pred_check
      _
    $region15: #{tpu_custom_call.1} parent=1 // pred_check_branch
      %38 = sbr.rel (0) target = $region17
    $region16: #{tpu_custom_call.1} parent=1 // pred_region
      %39 = dma.done [#allocation6], 256
    $region17: #{tpu_custom_call.1} parent=1 // pred_fallthru
      _
    %v40 = vld [vmem:[#allocation2] sm:$0xff]
    %v41 = vld [vmem:[#allocation2 + $0x8] sm:$0xff]
    %v42 = vld [vmem:[#allocation5] sm:$0xff]
    %v43 = vld [vmem:[#allocation5 + $0x8] sm:$0xff]
    %v44 = vmul.f32 %v42, 0.9
    %v45 = vmul.f32 %v43, 0.9
    %v46 = vadd.f32 %v44, 0.05
    %v47 = vadd.f32 %v45, 0.05
    %v48 = vadd.f32 %v40, 1e-07
    %v49 = vadd.f32 %v41, 1e-07
    %v50 = vlog2.pop %v48
    %v51 = vmul.f32 %v50, 0.6931472
    %v52 = vlog2.pop %v49
    %v53 = vmul.f32 %v52, 0.6931472
    %v54 = vsub.f32 1.0, %v40
    %v55 = vsub.f32 1.0, %v41
    %v56 = vadd.f32 %v54, 1e-07
    %v57 = vadd.f32 %v55, 1e-07
    %v58 = vlog2.pop %v56
    %v59 = vmul.f32 %v58, 0.6931472
    %v60 = vlog2.pop %v57
    %v61 = vmul.f32 %v60, 0.6931472
    %v62 = vsub.f32 %v51, %v59
    %v63 = vsub.f32 %v53, %v61
    %v64 = vmul.f32 %v46, %v62
    %v65 = vmul.f32 %v47, %v63
    %v66 = vadd.f32 %v64, %v59
    %v67 = vadd.f32 %v65, %v61
    %v68 = vsub.f32 0.0, %v66
    %v69 = vsub.f32 0.0, %v67
    %v70 = vadd.f32 %v68, %v69
    %71 = vst [vmem:[#allocation7] sm:$0xff] %v70
    // Predicated region
    $region18: #{tpu_custom_call.1} parent=1 // pred_check
      _
    $region19: #{tpu_custom_call.1} parent=1 // pred_check_branch
      %73 = sbr.rel (0) target = $region21
    $region20: #{tpu_custom_call.1} parent=1 // pred_region
      %s75 = ssub.s32 128, 128
      %76 = vsyncadd [#allocation4], %s75
      %s78 = sshll.u32 [#allocation7], 4
      %s79 = int_to_ptr.vmem [resolvable:$true] %s78
      %81 = dma.vmem_to_hbm [thread:$0]  %s79, 128, %s2, [#allocation4]
    $region21: #{tpu_custom_call.1} parent=1 // pred_fallthru
      _
    // Predicated region
    $region22: #{tpu_custom_call.1} parent=1 // pred_check
      _
    $region23: #{tpu_custom_call.1} parent=1 // pred_check_branch
      %83 = sbr.rel (0) target = $region25
    $region24: #{tpu_custom_call.1} parent=1 // pred_region
      %84 = dma.done [#allocation4], 128
    $region25: #{tpu_custom_call.1} parent=1 // pred_fallthru
      _
    %85 = vsyncpa [#allocation3], 1
    %86 = vsyncpa [#allocation6], 1
    %87 = vsyncpa [#allocation4], 1

</llo_original>
